<compile_context>
chip_gen: v7x
topology: tpu7x:2x2x1
jax: 0.10.0
libtpu: 0.0.40
codegen_flags: <defaults>
</compile_context>

<pallas_src>
import functools

import jax
import jax.numpy as jnp
from jax import lax
from jax.experimental import pallas as pl
from jax.experimental.pallas import tpu as pltpu

DESC_DIM = 128   # SIFT descriptor dimension
EPS = 1e-12      # matches torch.nn.functional.normalize default eps


def _rootsift_kernel(d_ref, o_ref, *, n_rows, tile):
    # d_ref / o_ref: (tile, DESC_DIM) VMEM tiles.  Input may be uint8/bf16/f32;
    # compute is done in f32 on the tile.
    x = d_ref[...].astype(jnp.float32)

    if n_rows is not None:
        # Ragged last block: zero-fill rows past the true row count so no NaNs
        # are produced (sqrt of garbage) even though Pallas masks the partial
        # writeback anyway.  n_rows / tile are static Python ints.
        rows = pl.program_id(0) * tile + lax.broadcasted_iota(
            jnp.int32, (tile, 1), 0)
        x = jnp.where(rows < n_rows, x, 0.0)

    # F.normalize(x, p=1, dim=1):  x / max(||x||_1, eps)
    # Narrow (tile, 1) reciprocal on the EUP + broadcast multiply instead of a
    # full-tile divide.  approx=True is safe: the scale cancels in the final
    # L2 normalization.
    l1 = jnp.sum(jnp.abs(x), axis=-1, keepdims=True)
    inv_l1 = pl.reciprocal(jnp.maximum(l1, EPS), approx=True)

    # torch.sqrt(...)
    x_sqrt = jnp.sqrt(x * inv_l1)

    # F.normalize(x, p=2, dim=1):  x / max(||x||_2, eps)
    # rsqrt(max(ssq, eps^2)) == 1 / max(sqrt(ssq), eps)
    ssq = jnp.sum(x_sqrt * x_sqrt, axis=-1, keepdims=True)
    inv_l2 = lax.rsqrt(jnp.maximum(ssq, EPS * EPS))

    o_ref[...] = (x_sqrt * inv_l2).astype(o_ref.dtype)


def rootsift_pallas(descs, tile_n=4096):
    """RootSIFT: F.normalize(sqrt(F.normalize(descs, p=1)), p=2), rows = keypoints.

    `descs` may be uint8 / bf16 / f32; it is passed to the kernel in its
    native dtype (narrow HBM traffic) and cast to f32 on-tile.  Output is f32.
    """
    n, d = descs.shape
    assert d == DESC_DIM

    # Keep the row tile a multiple of 32 so any supported input dtype
    # (u8 / bf16 / f32) respects its sublane packing tile.
    tile_n = max(32, (tile_n // 32) * 32)

    if n <= tile_n:
        # Single full-array block: no (8,128) divisibility concern (block ==
        # full array dims), no ragged tail, one grid step.
        tile, grid_steps, n_rows = n, 1, None
    else:
        tile = tile_n
        grid_steps = pl.cdiv(n, tile)
        n_rows = None if n % tile == 0 else n  # mask only when ragged

    kernel = functools.partial(_rootsift_kernel, n_rows=n_rows, tile=tile)

    return pl.pallas_call(
        kernel,
        out_shape=jax.ShapeDtypeStruct((n, d), jnp.float32),
        grid_spec=pltpu.PrefetchScalarGridSpec(
            num_scalar_prefetch=0,
            grid=(grid_steps,),
            in_specs=[pl.BlockSpec((tile, d), lambda i: (i, 0))],
            out_specs=pl.BlockSpec((tile, d), lambda i: (i, 0)),
        ),
        compiler_params=pltpu.CompilerParams(
            dimension_semantics=("parallel",)),
    )(descs)


def sift_model_forward(keypoints, raw_descriptors):
    """Mirrors SIFTModel.forward() output dict (sans the OpenCV detection).

    For best throughput, batch descriptors from multiple images/frames into a
    single [sum(N_i), 128] array before calling; the pallas_call launch cost
    dominates at ~300-row problem sizes.
    """
    descs_root_sift = rootsift_pallas(raw_descriptors)
    return {
        "keypoints": keypoints.astype(jnp.float32),
        "scores": None,
        "descriptors": descs_root_sift,
        "dense_descriptors": None,
    }


def _reference_rootsift(descs):
    x = descs.astype(jnp.float32)
    l1 = jnp.sum(jnp.abs(x), axis=-1, keepdims=True)
    x = x / jnp.maximum(l1, EPS)
    x = jnp.sqrt(x)
    l2 = jnp.sqrt(jnp.sum(x * x, axis=-1, keepdims=True))
    return x / jnp.maximum(l2, EPS)


if __name__ == "__main__":
    key = jax.random.PRNGKey(0)
    k_kp, k_desc = jax.random.split(key)

    # Small synthetic keypoint count; deliberately NOT a multiple of 8/32.
    num_kpts = 300

    # Synthetic deterministic "SIFT outputs": keypoint coords and raw uint8
    # descriptors (real SIFT descriptors are non-negative uint8 histograms).
    # The kernel consumes the uint8 array directly (4x less HBM read traffic).
    keypoints = jax.random.uniform(k_kp, (num_kpts, 2), jnp.float32) * 640.0
    raw_descs = jax.random.randint(
        k_desc, (num_kpts, DESC_DIM), 0, 256, dtype=jnp.int32).astype(jnp.uint8)

    out = sift_model_forward(keypoints, raw_descs)
    jax.block_until_ready(out["descriptors"])

    ref = _reference_rootsift(raw_descs)
    assert out["descriptors"].shape == (num_kpts, DESC_DIM)
    assert out["descriptors"].dtype == jnp.float32
    assert jnp.allclose(out["descriptors"], ref, atol=1e-5, rtol=1e-5)
    # RootSIFT descriptors should be (approximately) unit L2 norm.
    norms = jnp.linalg.norm(out["descriptors"], axis=-1)
    assert jnp.allclose(norms, 1.0, atol=1e-4)

    # Also exercise the multi-step grid with a ragged last block (300 rows,
    # 128-row tiles -> 3 steps, last block 44 valid rows).
    out_ragged = rootsift_pallas(raw_descs, tile_n=128)
    jax.block_until_ready(out_ragged)
    assert jnp.allclose(out_ragged, ref, atol=1e-5, rtol=1e-5)

    print("KERNEL_OK")
</pallas_src>

<mosaic_0001>
module attributes {stable_mosaic.version = 11 : i64} {
  func.func @_rootsift_kernel(%arg0: i32, %arg1: memref<300x128xi8, #tpu.memory_space<vmem>>, %arg2: memref<300x128xf32, #tpu.memory_space<vmem>>) attributes {dimension_semantics = [#tpu.dimension_semantics<parallel>], iteration_bounds = array<i64: 1>, scalar_prefetch = 0 : i64, scratch_operands = 0 : i64, tpu.core_type = #tpu.core_type<tc>, window_params = [{transform_indices = @transform_0, window_bounds = array<i64: 300, 128>}, {transform_indices = @transform_1, window_bounds = array<i64: 300, 128>}]} {
    %c0 = arith.constant 0 : index
    %c0_0 = arith.constant 0 : index
    %0 = vector.load %arg1[%c0, %c0_0] : memref<300x128xi8, #tpu.memory_space<vmem>>, vector<300x128xi8>
    %1 = arith.uitofp %0 : vector<300x128xi8> to vector<300x128xf32>
    %2 = math.absf %1 : vector<300x128xf32>
    %cst = arith.constant dense<0.000000e+00> : vector<300xf32>
    %3 = vector.multi_reduction <add>, %2, %cst [1] : vector<300x128xf32> to vector<300xf32>
    %4 = vector.shape_cast %3 : vector<300xf32> to vector<300x1xf32>
    %cst_1 = arith.constant 9.99999996E-13 : f32
    %5 = vector.broadcast %cst_1 : f32 to vector<300x1xf32>
    %6 = arith.maximumf %4, %5 : vector<300x1xf32>
    %7 = tpu.reciprocal %6 {approx = true} : vector<300x1xf32> -> vector<300x1xf32>
    %8 = vector.broadcast %7 : vector<300x1xf32> to vector<300x128xf32>
    %9 = arith.mulf %1, %8 : vector<300x128xf32>
    %10 = math.sqrt %9 : vector<300x128xf32>
    %11 = arith.mulf %10, %10 : vector<300x128xf32>
    %cst_2 = arith.constant dense<0.000000e+00> : vector<300xf32>
    %12 = vector.multi_reduction <add>, %11, %cst_2 [1] : vector<300x128xf32> to vector<300xf32>
    %13 = vector.shape_cast %12 : vector<300xf32> to vector<300x1xf32>
    %cst_3 = arith.constant 1.000000e-24 : f32
    %14 = vector.broadcast %cst_3 : f32 to vector<300x1xf32>
    %15 = arith.maximumf %13, %14 : vector<300x1xf32>
    %16 = math.rsqrt %15 : vector<300x1xf32>
    %17 = vector.broadcast %16 : vector<300x1xf32> to vector<300x128xf32>
    %18 = arith.mulf %10, %17 : vector<300x128xf32>
    %c0_4 = arith.constant 0 : index
    %c0_5 = arith.constant 0 : index
    %19 = vector.load %arg2[%c0_4, %c0_5] : memref<300x128xf32, #tpu.memory_space<vmem>>, vector<300x128xf32>
    tpu.vector_store %arg2[%c0_4, %c0_5], %18 {strides = array<i32>} : memref<300x128xf32, #tpu.memory_space<vmem>>, vector<300x128xf32>,
    return
  }
  func.func @transform_0(%arg0: i32) -> (i32, i32) {
    %c0_i32 = arith.constant 0 : i32
    %c0_i32_0 = arith.constant 0 : i32
    return %arg0, %c0_i32 : i32, i32
  }
  func.func @transform_1(%arg0: i32) -> (i32, i32) {
    %c0_i32 = arith.constant 0 : i32
    %c0_i32_0 = arith.constant 0 : i32
    return %arg0, %c0_i32 : i32, i32
  }
}

</mosaic_0001>

<llo_original>
// kernel: tpu_custom_call.1
$region0: #{tpu_custom_call.1}
  #allocation0 [shape = 'u32[]', space=smem, size = 0x4, offset = 0x4, fixed_abs, tag = 'smem constant byte address 0x4 - core index']
  #allocation1 [shape = 'u32[144,128]{1,0:T(1,128)}', space=vmem, size = 0x12000, scoped, tag = 'internal scratch']
  %s0 = inlined_call_operand.hbm [shape: u8[300,128], index: 0, kind: input, shape index: {}]
  %s1 = inlined_call_operand.hbm [shape: f32[300,128], index: 1, kind: output, shape index: {}]
  %s2 = sld [smem:[#allocation0]]
  $region18: #{tpu_custom_call.1} parent=0
    _
  %s4 = ssub.s32 1, %s2
  %s5 = scalar_select 0, %s4, %s2
  $region1: #{tpu_custom_call.1} parent=0
    #allocation2 [shape = 'u8[38912]{0}', space=vmem, size = 0x9800, scoped, tag = 'input window, operand 0, single buffered']
    #allocation3 [shape = 's32[1]{0}', space=sflag, size = 0x4, scoped, tag = 'scoped memory for tpu_custom_call.1']
    #allocation4 [shape = 's32[1]{0}', space=sflag, size = 0x4, scoped, tag = 'scoped memory for tpu_custom_call.1']
    #allocation5 [shape = 'u8[155648]{0}', space=vmem, size = 0x26000, scoped, tag = 'output window, operand 0, single buffered']
    %6 = vsyncpa [#allocation3], 0
    %7 = vsyncpa [#allocation4], 0
    // Predicated region
    $region2: #{tpu_custom_call.1} parent=1 // pred_check
      _
    $region3: #{tpu_custom_call.1} parent=1 // pred_check_branch
      %9 = sbr.rel (0) target = $region5
    $region4: #{tpu_custom_call.1} parent=1 // pred_region
      %s11 = ssub.s32 1216, 1216
      %12 = vsyncadd [#allocation3], %s11
      %s13 = sshll.u32 [#allocation2], 4
      %s14 = int_to_ptr.vmem [resolvable:$true] %s13
      %19 = dma.hbm_to_vmem [thread:$0]  %s0, 1216, %s14, [#allocation3], 32, 32, 2
    $region5: #{tpu_custom_call.1} parent=1 // pred_fallthru
      _
    // Predicated region
    $region6: #{tpu_custom_call.1} parent=1 // pred_check
      _
    $region7: #{tpu_custom_call.1} parent=1 // pred_check_branch
      %21 = sbr.rel (0) target = $region9
    $region8: #{tpu_custom_call.1} parent=1 // pred_region
      %22 = dma.done [#allocation3], 1216
    $region9: #{tpu_custom_call.1} parent=1 // pred_fallthru
      _
    %v23 = vld [vmem:[#allocation2] sm:$0x3]
    %v24 = vld [vmem:[#allocation2 + $0x2] sm:$0x3]
    %v25 = vld [vmem:[#allocation2 + $0x4] sm:$0x3]
    %v26 = vld [vmem:[#allocation2 + $0x6] sm:$0x3]
    %v27 = vld [vmem:[#allocation2 + $0x8] sm:$0x3]
    %v28 = vld [vmem:[#allocation2 + $0xa] sm:$0x3]
    %v29 = vld [vmem:[#allocation2 + $0xc] sm:$0x3]
    %v30 = vld [vmem:[#allocation2 + $0xe] sm:$0x3]
    %v31 = vld [vmem:[#allocation2 + $0x10] sm:$0x3]
    %v32 = vld [vmem:[#allocation2 + $0x12] sm:$0x3]
    %v33 = vld [vmem:[#allocation2 + $0x14] sm:$0x3]
    %v34 = vld [vmem:[#allocation2 + $0x16] sm:$0x3]
    %v35 = vld [vmem:[#allocation2 + $0x18] sm:$0x3]
    %v36 = vld [vmem:[#allocation2 + $0x1a] sm:$0x3]
    %v37 = vld [vmem:[#allocation2 + $0x1c] sm:$0x3]
    %v38 = vld [vmem:[#allocation2 + $0x1e] sm:$0x3]
    %v39 = vld [vmem:[#allocation2 + $0x20] sm:$0x3]
    %v40 = vld [vmem:[#allocation2 + $0x22] sm:$0x3]
    %v41 = vld [vmem:[#allocation2 + $0x24] sm:$0x3]
    %v42 = vld [vmem:[#allocation2 + $0x26] sm:$0x3]
    %v43 = vld [vmem:[#allocation2 + $0x28] sm:$0x3]
    %v44 = vld [vmem:[#allocation2 + $0x2a] sm:$0x3]
    %v45 = vld [vmem:[#allocation2 + $0x2c] sm:$0x3]
    %v46 = vld [vmem:[#allocation2 + $0x2e] sm:$0x3]
    %v47 = vld [vmem:[#allocation2 + $0x30] sm:$0x3]
    %v48 = vld [vmem:[#allocation2 + $0x32] sm:$0x3]
    %v49 = vld [vmem:[#allocation2 + $0x34] sm:$0x3]
    %v50 = vld [vmem:[#allocation2 + $0x36] sm:$0x3]
    %v51 = vld [vmem:[#allocation2 + $0x38] sm:$0x3]
    %v52 = vld [vmem:[#allocation2 + $0x3a] sm:$0x3]
    %v53 = vld [vmem:[#allocation2 + $0x3c] sm:$0x3]
    %v54 = vld [vmem:[#allocation2 + $0x3e] sm:$0x3]
    %v55 = vld [vmem:[#allocation2 + $0x40] sm:$0x3]
    %v56 = vld [vmem:[#allocation2 + $0x42] sm:$0x3]
    %v57 = vld [vmem:[#allocation2 + $0x44] sm:$0x3]
    %v58 = vld [vmem:[#allocation2 + $0x46] sm:$0x3]
    %v59 = vld [vmem:[#allocation2 + $0x48] sm:$0x3]
    %v60 = vld [vmem:[#allocation2 + $0x4a] sm:$0x1]
    %v61 = vunpack.c.0.s8 %v23
    %v62 = vunpack.c.0.s8 %v24
    %v63 = vunpack.c.0.s8 %v25
    %v64 = vunpack.c.0.s8 %v26
    %v65 = vunpack.c.0.s8 %v27
    %v66 = vunpack.c.0.s8 %v28
    %v67 = vunpack.c.0.s8 %v29
    %v68 = vunpack.c.0.s8 %v30
    %v69 = vunpack.c.0.s8 %v31
    %v70 = vunpack.c.0.s8 %v32
    %v71 = vunpack.c.0.s8 %v33
    %v72 = vunpack.c.0.s8 %v34
    %v73 = vunpack.c.0.s8 %v35
    %v74 = vunpack.c.0.s8 %v36
    %v75 = vunpack.c.0.s8 %v37
    %v76 = vunpack.c.0.s8 %v38
    %v77 = vunpack.c.0.s8 %v39
    %v78 = vunpack.c.0.s8 %v40
    %v79 = vunpack.c.0.s8 %v41
    %v80 = vunpack.c.0.s8 %v42
    %v81 = vunpack.c.0.s8 %v43
    %v82 = vunpack.c.0.s8 %v44
    %v83 = vunpack.c.0.s8 %v45
    %v84 = vunpack.c.0.s8 %v46
    %v85 = vunpack.c.0.s8 %v47
    %v86 = vunpack.c.0.s8 %v48
    %v87 = vunpack.c.0.s8 %v49
    %v88 = vunpack.c.0.s8 %v50
    %v89 = vunpack.c.0.s8 %v51
    %v90 = vunpack.c.0.s8 %v52
    %v91 = vunpack.c.0.s8 %v53
    %v92 = vunpack.c.0.s8 %v54
    %v93 = vunpack.c.0.s8 %v55
    %v94 = vunpack.c.0.s8 %v56
    %v95 = vunpack.c.0.s8 %v57
    %v96 = vunpack.c.0.s8 %v58
    %v97 = vunpack.c.0.s8 %v59
    %v98 = vunpack.c.0.s8 %v60
    %v99 = vand.u32 %v61, 255
    %v100 = vand.u32 %v62, 255
    %v101 = vand.u32 %v63, 255
    %v102 = vand.u32 %v64, 255
    %v103 = vand.u32 %v65, 255
    %v104 = vand.u32 %v66, 255
    %v105 = vand.u32 %v67, 255
    %v106 = vand.u32 %v68, 255
    %v107 = vand.u32 %v69, 255
    %v108 = vand.u32 %v70, 255
    %v109 = vand.u32 %v71, 255
    %v110 = vand.u32 %v72, 255
    %v111 = vand.u32 %v73, 255
    %v112 = vand.u32 %v74, 255
    %v113 = vand.u32 %v75, 255
    %v114 = vand.u32 %v76, 255
    %v115 = vand.u32 %v77, 255
    %v116 = vand.u32 %v78, 255
    %v117 = vand.u32 %v79, 255
    %v118 = vand.u32 %v80, 255
    %v119 = vand.u32 %v81, 255
    %v120 = vand.u32 %v82, 255
    %v121 = vand.u32 %v83, 255
    %v122 = vand.u32 %v84, 255
    %v123 = vand.u32 %v85, 255
    %v124 = vand.u32 %v86, 255
    %v125 = vand.u32 %v87, 255
    %v126 = vand.u32 %v88, 255
    %v127 = vand.u32 %v89, 255
    %v128 = vand.u32 %v90, 255
    %v129 = vand.u32 %v91, 255
    %v130 = vand.u32 %v92, 255
    %v131 = vand.u32 %v93, 255
    %v132 = vand.u32 %v94, 255
    %v133 = vand.u32 %v95, 255
    %v134 = vand.u32 %v96, 255
    %v135 = vand.u32 %v97, 255
    %v136 = vand.u32 %v98, 255
    %v137 = vcvt.s32.f32 %v99
    %v138 = vcvt.s32.f32 %v100
    %v139 = vcvt.s32.f32 %v101
    %v140 = vcvt.s32.f32 %v102
    %v141 = vcvt.s32.f32 %v103
    %v142 = vcvt.s32.f32 %v104
    %v143 = vcvt.s32.f32 %v105
    %v144 = vcvt.s32.f32 %v106
    %v145 = vcvt.s32.f32 %v107
    %v146 = vcvt.s32.f32 %v108
    %v147 = vcvt.s32.f32 %v109
    %v148 = vcvt.s32.f32 %v110
    %v149 = vcvt.s32.f32 %v111
    %v150 = vcvt.s32.f32 %v112
    %v151 = vcvt.s32.f32 %v113
    %v152 = vcvt.s32.f32 %v114
    %v153 = vcvt.s32.f32 %v115
    %v154 = vcvt.s32.f32 %v116
    %v155 = vcvt.s32.f32 %v117
    %v156 = vcvt.s32.f32 %v118
    %v157 = vcvt.s32.f32 %v119
    %v158 = vcvt.s32.f32 %v120
    %v159 = vcvt.s32.f32 %v121
    %v160 = vcvt.s32.f32 %v122
    %v161 = vcvt.s32.f32 %v123
    %v162 = vcvt.s32.f32 %v124
    %v163 = vcvt.s32.f32 %v125
    %v164 = vcvt.s32.f32 %v126
    %v165 = vcvt.s32.f32 %v127
    %v166 = vcvt.s32.f32 %v128
    %v167 = vcvt.s32.f32 %v129
    %v168 = vcvt.s32.f32 %v130
    %v169 = vcvt.s32.f32 %v131
    %v170 = vcvt.s32.f32 %v132
    %v171 = vcvt.s32.f32 %v133
    %v172 = vcvt.s32.f32 %v134
    %v173 = vcvt.s32.f32 %v135
    %v174 = vcvt.s32.f32 %v136
    %v175 = vand.u32 2147483647, %v137
    %v176 = vand.u32 2147483647, %v138
    %v177 = vand.u32 2147483647, %v139
    %v178 = vand.u32 2147483647, %v140
    %v179 = vand.u32 2147483647, %v141
    %v180 = vand.u32 2147483647, %v142
    %v181 = vand.u32 2147483647, %v143
    %v182 = vand.u32 2147483647, %v144
    %v183 = vand.u32 2147483647, %v145
    %v184 = vand.u32 2147483647, %v146
    %v185 = vand.u32 2147483647, %v147
    %v186 = vand.u32 2147483647, %v148
    %v187 = vand.u32 2147483647, %v149
    %v188 = vand.u32 2147483647, %v150
    %v189 = vand.u32 2147483647, %v151
    %v190 = vand.u32 2147483647, %v152
    %v191 = vand.u32 2147483647, %v153
    %v192 = vand.u32 2147483647, %v154
    %v193 = vand.u32 2147483647, %v155
    %v194 = vand.u32 2147483647, %v156
    %v195 = vand.u32 2147483647, %v157
    %v196 = vand.u32 2147483647, %v158
    %v197 = vand.u32 2147483647, %v159
    %v198 = vand.u32 2147483647, %v160
    %v199 = vand.u32 2147483647, %v161
    %v200 = vand.u32 2147483647, %v162
    %v201 = vand.u32 2147483647, %v163
    %v202 = vand.u32 2147483647, %v164
    %v203 = vand.u32 2147483647, %v165
    %v204 = vand.u32 2147483647, %v166
    %v205 = vand.u32 2147483647, %v167
    %v206 = vand.u32 2147483647, %v168
    %v207 = vand.u32 2147483647, %v169
    %v208 = vand.u32 2147483647, %v170
    %v209 = vand.u32 2147483647, %v171
    %v210 = vand.u32 2147483647, %v172
    %v211 = vand.u32 2147483647, %v173
    %v212 = vand.u32 2147483647, %v174
    %213 = vadd.xlane.f32.xlu0 %v175
    %v214 = vpop.xlane.xlu0 %213
    %215 = vadd.xlane.f32.xlu0 %v176
    %v216 = vpop.xlane.xlu0 %215
    %217 = vadd.xlane.f32.xlu0 %v177
    %v218 = vpop.xlane.xlu0 %217
    %219 = vadd.xlane.f32.xlu0 %v178
    %v220 = vpop.xlane.xlu0 %219
    %221 = vadd.xlane.f32.xlu0 %v179
    %v222 = vpop.xlane.xlu0 %221
    %223 = vadd.xlane.f32.xlu0 %v180
    %v224 = vpop.xlane.xlu0 %223
    %225 = vadd.xlane.f32.xlu0 %v181
    %v226 = vpop.xlane.xlu0 %225
    %227 = vadd.xlane.f32.xlu0 %v182
    %v228 = vpop.xlane.xlu0 %227
    %229 = vadd.xlane.f32.xlu0 %v183
    %v230 = vpop.xlane.xlu0 %229
    %231 = vadd.xlane.f32.xlu0 %v184
    %v232 = vpop.xlane.xlu0 %231
    %233 = vadd.xlane.f32.xlu0 %v185
    %v234 = vpop.xlane.xlu0 %233
    %235 = vadd.xlane.f32.xlu0 %v186
    %v236 = vpop.xlane.xlu0 %235
    %237 = vadd.xlane.f32.xlu0 %v187
    %v238 = vpop.xlane.xlu0 %237
    %239 = vadd.xlane.f32.xlu0 %v188
    %v240 = vpop.xlane.xlu0 %239
    %241 = vadd.xlane.f32.xlu0 %v189
    %v242 = vpop.xlane.xlu0 %241
    %243 = vadd.xlane.f32.xlu0 %v190
    %v244 = vpop.xlane.xlu0 %243
    %245 = vadd.xlane.f32.xlu0 %v191
    %v246 = vpop.xlane.xlu0 %245
    %247 = vadd.xlane.f32.xlu0 %v192
    %v248 = vpop.xlane.xlu0 %247
    %249 = vadd.xlane.f32.xlu0 %v193
    %v250 = vpop.xlane.xlu0 %249
    %251 = vadd.xlane.f32.xlu0 %v194
    %v252 = vpop.xlane.xlu0 %251
    %253 = vadd.xlane.f32.xlu0 %v195
    %v254 = vpop.xlane.xlu0 %253
    %255 = vadd.xlane.f32.xlu0 %v196
    %v256 = vpop.xlane.xlu0 %255
    %257 = vadd.xlane.f32.xlu0 %v197
    %v258 = vpop.xlane.xlu0 %257
    %259 = vadd.xlane.f32.xlu0 %v198
    %v260 = vpop.xlane.xlu0 %259
    %261 = vadd.xlane.f32.xlu0 %v199
    %v262 = vpop.xlane.xlu0 %261
    %263 = vadd.xlane.f32.xlu0 %v200
    %v264 = vpop.xlane.xlu0 %263
    %265 = vadd.xlane.f32.xlu0 %v201
    %v266 = vpop.xlane.xlu0 %265
    %267 = vadd.xlane.f32.xlu0 %v202
    %v268 = vpop.xlane.xlu0 %267
    %269 = vadd.xlane.f32.xlu0 %v203
    %v270 = vpop.xlane.xlu0 %269
    %271 = vadd.xlane.f32.xlu0 %v204
    %v272 = vpop.xlane.xlu0 %271
    %273 = vadd.xlane.f32.xlu0 %v205
    %v274 = vpop.xlane.xlu0 %273
    %275 = vadd.xlane.f32.xlu0 %v206
    %v276 = vpop.xlane.xlu0 %275
    %277 = vadd.xlane.f32.xlu0 %v207
    %v278 = vpop.xlane.xlu0 %277
    %279 = vadd.xlane.f32.xlu0 %v208
    %v280 = vpop.xlane.xlu0 %279
    %281 = vadd.xlane.f32.xlu0 %v209
    %v282 = vpop.xlane.xlu0 %281
    %283 = vadd.xlane.f32.xlu0 %v210
    %v284 = vpop.xlane.xlu0 %283
    %285 = vadd.xlane.f32.xlu0 %v211
    %v286 = vpop.xlane.xlu0 %285
    %vm287 = vcmask 1043456
    %v288 = vsel %vm287, %v212, 0.0
    %289 = vadd.xlane.f32.xlu0 %v288
    %v290 = vpop.xlane.xlu0 %289
    %v291 = vmax.f32 %v214, 1e-12
    %v292 = vmax.f32 %v216, 1e-12
    %v293 = vmax.f32 %v218, 1e-12
    %v294 = vmax.f32 %v220, 1e-12
    %v295 = vmax.f32 %v222, 1e-12
    %v296 = vmax.f32 %v224, 1e-12
    %v297 = vmax.f32 %v226, 1e-12
    %v298 = vmax.f32 %v228, 1e-12
    %v299 = vmax.f32 %v230, 1e-12
    %v300 = vmax.f32 %v232, 1e-12
    %v301 = vmax.f32 %v234, 1e-12
    %v302 = vmax.f32 %v236, 1e-12
    %v303 = vmax.f32 %v238, 1e-12
    %v304 = vmax.f32 %v240, 1e-12
    %v305 = vmax.f32 %v242, 1e-12
    %v306 = vmax.f32 %v244, 1e-12
    %v307 = vmax.f32 %v246, 1e-12
    %v308 = vmax.f32 %v248, 1e-12
    %v309 = vmax.f32 %v250, 1e-12
    %v310 = vmax.f32 %v252, 1e-12
    %v311 = vmax.f32 %v254, 1e-12
    %v312 = vmax.f32 %v256, 1e-12
    %v313 = vmax.f32 %v258, 1e-12
    %v314 = vmax.f32 %v260, 1e-12
    %v315 = vmax.f32 %v262, 1e-12
    %v316 = vmax.f32 %v264, 1e-12
    %v317 = vmax.f32 %v266, 1e-12
    %v318 = vmax.f32 %v268, 1e-12
    %v319 = vmax.f32 %v270, 1e-12
    %v320 = vmax.f32 %v272, 1e-12
    %v321 = vmax.f32 %v274, 1e-12
    %v322 = vmax.f32 %v276, 1e-12
    %v323 = vmax.f32 %v278, 1e-12
    %v324 = vmax.f32 %v280, 1e-12
    %v325 = vmax.f32 %v282, 1e-12
    %v326 = vmax.f32 %v284, 1e-12
    %v327 = vmax.f32 %v286, 1e-12
    %v328 = vmax.f32 %v290, 1e-12
    %v329 = vrcp.pop %v291
    %v330 = vrcp.pop %v292
    %v331 = vrcp.pop %v293
    %v332 = vrcp.pop %v294
    %v333 = vrcp.pop %v295
    %v334 = vrcp.pop %v296
    %v335 = vrcp.pop %v297
    %v336 = vrcp.pop %v298
    %v337 = vrcp.pop %v299
    %v338 = vrcp.pop %v300
    %v339 = vrcp.pop %v301
    %v340 = vrcp.pop %v302
    %v341 = vrcp.pop %v303
    %v342 = vrcp.pop %v304
    %v343 = vrcp.pop %v305
    %v344 = vrcp.pop %v306
    %v345 = vrcp.pop %v307
    %v346 = vrcp.pop %v308
    %v347 = vrcp.pop %v309
    %v348 = vrcp.pop %v310
    %v349 = vrcp.pop %v311
    %v350 = vrcp.pop %v312
    %v351 = vrcp.pop %v313
    %v352 = vrcp.pop %v314
    %v353 = vrcp.pop %v315
    %v354 = vrcp.pop %v316
    %v355 = vrcp.pop %v317
    %v356 = vrcp.pop %v318
    %v357 = vrcp.pop %v319
    %v358 = vrcp.pop %v320
    %v359 = vrcp.pop %v321
    %v360 = vrcp.pop %v322
    %v361 = vrcp.pop %v323
    %v362 = vrcp.pop %v324
    %v363 = vrcp.pop %v325
    %v364 = vrcp.pop %v326
    %v365 = vrcp.pop %v327
    %v366 = vrcp.pop %v328
    %v367 = vmul.f32 %v137, %v329
    %v368 = vmul.f32 %v138, %v330
    %v369 = vmul.f32 %v139, %v331
    %v370 = vmul.f32 %v140, %v332
    %v371 = vmul.f32 %v141, %v333
    %v372 = vmul.f32 %v142, %v334
    %v373 = vmul.f32 %v143, %v335
    %v374 = vmul.f32 %v144, %v336
    %v375 = vmul.f32 %v145, %v337
    %v376 = vmul.f32 %v146, %v338
    %v377 = vmul.f32 %v147, %v339
    %v378 = vmul.f32 %v148, %v340
    %v379 = vmul.f32 %v149, %v341
    %v380 = vmul.f32 %v150, %v342
    %v381 = vmul.f32 %v151, %v343
    %v382 = vmul.f32 %v152, %v344
    %v383 = vmul.f32 %v153, %v345
    %v384 = vmul.f32 %v154, %v346
    %v385 = vmul.f32 %v155, %v347
    %v386 = vmul.f32 %v156, %v348
    %v387 = vmul.f32 %v157, %v349
    %v388 = vmul.f32 %v158, %v350
    %v389 = vmul.f32 %v159, %v351
    %v390 = vmul.f32 %v160, %v352
    %v391 = vmul.f32 %v161, %v353
    %v392 = vmul.f32 %v162, %v354
    %v393 = vmul.f32 %v163, %v355
    %v394 = vmul.f32 %v164, %v356
    %v395 = vmul.f32 %v165, %v357
    %v396 = vmul.f32 %v166, %v358
    %v397 = vmul.f32 %v167, %v359
    %v398 = vmul.f32 %v168, %v360
    %v399 = vmul.f32 %v169, %v361
    %v400 = vmul.f32 %v170, %v362
    %v401 = vmul.f32 %v171, %v363
    %v402 = vmul.f32 %v172, %v364
    %v403 = vmul.f32 %v173, %v365
    %v404 = vmul.f32 %v174, %v366
    %v405 = vrsqrt.pop %v367
    %v406 = vmul.f32 %v367, %v405
    %vm407 = vcmp.eq.f32.partialorder %v367, inf
    %v408 = vsel %vm407, %v367, %v406
    %vm409 = vcmp.eq.f32.partialorder %v367, 0.0
    %v410 = vand.u32 %v367, 2147483648
    %v411 = vsel %vm409, %v410, %v408
    %v412 = vrsqrt.pop %v368
    %v413 = vmul.f32 %v368, %v412
    %vm414 = vcmp.eq.f32.partialorder %v368, inf
    %v415 = vsel %vm414, %v368, %v413
    %vm416 = vcmp.eq.f32.partialorder %v368, 0.0
    %v417 = vand.u32 %v368, 2147483648
    %v418 = vsel %vm416, %v417, %v415
    %v419 = vrsqrt.pop %v369
    %v420 = vmul.f32 %v369, %v419
    %vm421 = vcmp.eq.f32.partialorder %v369, inf
    %v422 = vsel %vm421, %v369, %v420
    %vm423 = vcmp.eq.f32.partialorder %v369, 0.0
    %v424 = vand.u32 %v369, 2147483648
    %v425 = vsel %vm423, %v424, %v422
    %v426 = vrsqrt.pop %v370
    %v427 = vmul.f32 %v370, %v426
    %vm428 = vcmp.eq.f32.partialorder %v370, inf
    %v429 = vsel %vm428, %v370, %v427
    %vm430 = vcmp.eq.f32.partialorder %v370, 0.0
    %v431 = vand.u32 %v370, 2147483648
    %v432 = vsel %vm430, %v431, %v429
    %v433 = vrsqrt.pop %v371
    %v434 = vmul.f32 %v371, %v433
    %vm435 = vcmp.eq.f32.partialorder %v371, inf
    %v436 = vsel %vm435, %v371, %v434
    %vm437 = vcmp.eq.f32.partialorder %v371, 0.0
    %v438 = vand.u32 %v371, 2147483648
    %v439 = vsel %vm437, %v438, %v436
    %v440 = vrsqrt.pop %v372
    %v441 = vmul.f32 %v372, %v440
    %vm442 = vcmp.eq.f32.partialorder %v372, inf
    %v443 = vsel %vm442, %v372, %v441
    %vm444 = vcmp.eq.f32.partialorder %v372, 0.0
    %v445 = vand.u32 %v372, 2147483648
    %v446 = vsel %vm444, %v445, %v443
    %v447 = vrsqrt.pop %v373
    %v448 = vmul.f32 %v373, %v447
    %vm449 = vcmp.eq.f32.partialorder %v373, inf
    %v450 = vsel %vm449, %v373, %v448
    %vm451 = vcmp.eq.f32.partialorder %v373, 0.0
    %v452 = vand.u32 %v373, 2147483648
    %v453 = vsel %vm451, %v452, %v450
    %v454 = vrsqrt.pop %v374
    %v455 = vmul.f32 %v374, %v454
    %vm456 = vcmp.eq.f32.partialorder %v374, inf
    %v457 = vsel %vm456, %v374, %v455
    %vm458 = vcmp.eq.f32.partialorder %v374, 0.0
    %v459 = vand.u32 %v374, 2147483648
    %v460 = vsel %vm458, %v459, %v457
    %v461 = vrsqrt.pop %v375
    %v462 = vmul.f32 %v375, %v461
    %vm463 = vcmp.eq.f32.partialorder %v375, inf
    %v464 = vsel %vm463, %v375, %v462
    %vm465 = vcmp.eq.f32.partialorder %v375, 0.0
    %v466 = vand.u32 %v375, 2147483648
    %v467 = vsel %vm465, %v466, %v464
    %v468 = vrsqrt.pop %v376
    %v469 = vmul.f32 %v376, %v468
    %vm470 = vcmp.eq.f32.partialorder %v376, inf
    %v471 = vsel %vm470, %v376, %v469
    %vm472 = vcmp.eq.f32.partialorder %v376, 0.0
    %v473 = vand.u32 %v376, 2147483648
    %v474 = vsel %vm472, %v473, %v471
    %v475 = vrsqrt.pop %v377
    %v476 = vmul.f32 %v377, %v475
    %vm477 = vcmp.eq.f32.partialorder %v377, inf
    %v478 = vsel %vm477, %v377, %v476
    %vm479 = vcmp.eq.f32.partialorder %v377, 0.0
    %v480 = vand.u32 %v377, 2147483648
    %v481 = vsel %vm479, %v480, %v478
    %v482 = vrsqrt.pop %v378
    %v483 = vmul.f32 %v378, %v482
    %vm484 = vcmp.eq.f32.partialorder %v378, inf
    %v485 = vsel %vm484, %v378, %v483
    %vm486 = vcmp.eq.f32.partialorder %v378, 0.0
    %v487 = vand.u32 %v378, 2147483648
    %v488 = vsel %vm486, %v487, %v485
    %v489 = vrsqrt.pop %v379
    %v490 = vmul.f32 %v379, %v489
    %vm491 = vcmp.eq.f32.partialorder %v379, inf
    %v492 = vsel %vm491, %v379, %v490
    %vm493 = vcmp.eq.f32.partialorder %v379, 0.0
    %v494 = vand.u32 %v379, 2147483648
    %v495 = vsel %vm493, %v494, %v492
    %v496 = vrsqrt.pop %v380
    %v497 = vmul.f32 %v380, %v496
    %vm498 = vcmp.eq.f32.partialorder %v380, inf
    %v499 = vsel %vm498, %v380, %v497
    %vm500 = vcmp.eq.f32.partialorder %v380, 0.0
    %v501 = vand.u32 %v380, 2147483648
    %v502 = vsel %vm500, %v501, %v499
    %v503 = vrsqrt.pop %v381
    %v504 = vmul.f32 %v381, %v503
    %vm505 = vcmp.eq.f32.partialorder %v381, inf
    %v506 = vsel %vm505, %v381, %v504
    %vm507 = vcmp.eq.f32.partialorder %v381, 0.0
    %v508 = vand.u32 %v381, 2147483648
    %v509 = vsel %vm507, %v508, %v506
    %v510 = vrsqrt.pop %v382
    %v511 = vmul.f32 %v382, %v510
    %vm512 = vcmp.eq.f32.partialorder %v382, inf
    %v513 = vsel %vm512, %v382, %v511
    %vm514 = vcmp.eq.f32.partialorder %v382, 0.0
    %v515 = vand.u32 %v382, 2147483648
    %v516 = vsel %vm514, %v515, %v513
    %v517 = vrsqrt.pop %v383
    %v518 = vmul.f32 %v383, %v517
    %vm519 = vcmp.eq.f32.partialorder %v383, inf
    %v520 = vsel %vm519, %v383, %v518
    %vm521 = vcmp.eq.f32.partialorder %v383, 0.0
    %v522 = vand.u32 %v383, 2147483648
    %v523 = vsel %vm521, %v522, %v520
    %v524 = vrsqrt.pop %v384
    %v525 = vmul.f32 %v384, %v524
    %vm526 = vcmp.eq.f32.partialorder %v384, inf
    %v527 = vsel %vm526, %v384, %v525
    %vm528 = vcmp.eq.f32.partialorder %v384, 0.0
    %v529 = vand.u32 %v384, 2147483648
    %v530 = vsel %vm528, %v529, %v527
    %v531 = vrsqrt.pop %v385
    %v532 = vmul.f32 %v385, %v531
    %vm533 = vcmp.eq.f32.partialorder %v385, inf
    %v534 = vsel %vm533, %v385, %v532
    %vm535 = vcmp.eq.f32.partialorder %v385, 0.0
    %v536 = vand.u32 %v385, 2147483648
    %v537 = vsel %vm535, %v536, %v534
    %v538 = vrsqrt.pop %v386
    %v539 = vmul.f32 %v386, %v538
    %vm540 = vcmp.eq.f32.partialorder %v386, inf
    %v541 = vsel %vm540, %v386, %v539
    %vm542 = vcmp.eq.f32.partialorder %v386, 0.0
    %v543 = vand.u32 %v386, 2147483648
    %v544 = vsel %vm542, %v543, %v541
    %v545 = vrsqrt.pop %v387
    %v546 = vmul.f32 %v387, %v545
    %vm547 = vcmp.eq.f32.partialorder %v387, inf
    %v548 = vsel %vm547, %v387, %v546
    %vm549 = vcmp.eq.f32.partialorder %v387, 0.0
    %v550 = vand.u32 %v387, 2147483648
    %v551 = vsel %vm549, %v550, %v548
    %v552 = vrsqrt.pop %v388
    %v553 = vmul.f32 %v388, %v552
    %vm554 = vcmp.eq.f32.partialorder %v388, inf
    %v555 = vsel %vm554, %v388, %v553
    %vm556 = vcmp.eq.f32.partialorder %v388, 0.0
    %v557 = vand.u32 %v388, 2147483648
    %v558 = vsel %vm556, %v557, %v555
    %v559 = vrsqrt.pop %v389
    %v560 = vmul.f32 %v389, %v559
    %vm561 = vcmp.eq.f32.partialorder %v389, inf
    %v562 = vsel %vm561, %v389, %v560
    %vm563 = vcmp.eq.f32.partialorder %v389, 0.0
    %v564 = vand.u32 %v389, 2147483648
    %v565 = vsel %vm563, %v564, %v562
    %v566 = vrsqrt.pop %v390
    %v567 = vmul.f32 %v390, %v566
    %vm568 = vcmp.eq.f32.partialorder %v390, inf
    %v569 = vsel %vm568, %v390, %v567
    %vm570 = vcmp.eq.f32.partialorder %v390, 0.0
    %v571 = vand.u32 %v390, 2147483648
    %v572 = vsel %vm570, %v571, %v569
    %v573 = vrsqrt.pop %v391
    %v574 = vmul.f32 %v391, %v573
    %vm575 = vcmp.eq.f32.partialorder %v391, inf
    %v576 = vsel %vm575, %v391, %v574
    %vm577 = vcmp.eq.f32.partialorder %v391, 0.0
    %v578 = vand.u32 %v391, 2147483648
    %v579 = vsel %vm577, %v578, %v576
    %v580 = vrsqrt.pop %v392
    %v581 = vmul.f32 %v392, %v580
    %vm582 = vcmp.eq.f32.partialorder %v392, inf
    %v583 = vsel %vm582, %v392, %v581
    %vm584 = vcmp.eq.f32.partialorder %v392, 0.0
    %v585 = vand.u32 %v392, 2147483648
    %v586 = vsel %vm584, %v585, %v583
    %v587 = vrsqrt.pop %v393
    %v588 = vmul.f32 %v393, %v587
    %vm589 = vcmp.eq.f32.partialorder %v393, inf
    %v590 = vsel %vm589, %v393, %v588
    %vm591 = vcmp.eq.f32.partialorder %v393, 0.0
    %v592 = vand.u32 %v393, 2147483648
    %v593 = vsel %vm591, %v592, %v590
    %v594 = vrsqrt.pop %v394
    %v595 = vmul.f32 %v394, %v594
    %vm596 = vcmp.eq.f32.partialorder %v394, inf
    %v597 = vsel %vm596, %v394, %v595
    %vm598 = vcmp.eq.f32.partialorder %v394, 0.0
    %v599 = vand.u32 %v394, 2147483648
    %v600 = vsel %vm598, %v599, %v597
    %v601 = vrsqrt.pop %v395
    %v602 = vmul.f32 %v395, %v601
    %vm603 = vcmp.eq.f32.partialorder %v395, inf
    %v604 = vsel %vm603, %v395, %v602
    %vm605 = vcmp.eq.f32.partialorder %v395, 0.0
    %v606 = vand.u32 %v395, 2147483648
    %v607 = vsel %vm605, %v606, %v604
    %v608 = vrsqrt.pop %v396
    %v609 = vmul.f32 %v396, %v608
    %vm610 = vcmp.eq.f32.partialorder %v396, inf
    %v611 = vsel %vm610, %v396, %v609
    %vm612 = vcmp.eq.f32.partialorder %v396, 0.0
    %v613 = vand.u32 %v396, 2147483648
    %v614 = vsel %vm612, %v613, %v611
    %v615 = vrsqrt.pop %v397
    %v616 = vmul.f32 %v397, %v615
    %vm617 = vcmp.eq.f32.partialorder %v397, inf
    %v618 = vsel %vm617, %v397, %v616
    %vm619 = vcmp.eq.f32.partialorder %v397, 0.0
    %v620 = vand.u32 %v397, 2147483648
    %v621 = vsel %vm619, %v620, %v618
    %v622 = vrsqrt.pop %v398
    %v623 = vmul.f32 %v398, %v622
    %vm624 = vcmp.eq.f32.partialorder %v398, inf
    %v625 = vsel %vm624, %v398, %v623
    %vm626 = vcmp.eq.f32.partialorder %v398, 0.0
    %v627 = vand.u32 %v398, 2147483648
    %v628 = vsel %vm626, %v627, %v625
    %v629 = vrsqrt.pop %v399
    %v630 = vmul.f32 %v399, %v629
    %vm631 = vcmp.eq.f32.partialorder %v399, inf
    %v632 = vsel %vm631, %v399, %v630
    %vm633 = vcmp.eq.f32.partialorder %v399, 0.0
    %v634 = vand.u32 %v399, 2147483648
    %v635 = vsel %vm633, %v634, %v632
    %v636 = vrsqrt.pop %v400
    %v637 = vmul.f32 %v400, %v636
    %vm638 = vcmp.eq.f32.partialorder %v400, inf
    %v639 = vsel %vm638, %v400, %v637
    %vm640 = vcmp.eq.f32.partialorder %v400, 0.0
    %v641 = vand.u32 %v400, 2147483648
    %v642 = vsel %vm640, %v641, %v639
    %v643 = vrsqrt.pop %v401
    %v644 = vmul.f32 %v401, %v643
    %vm645 = vcmp.eq.f32.partialorder %v401, inf
    %v646 = vsel %vm645, %v401, %v644
    %vm647 = vcmp.eq.f32.partialorder %v401, 0.0
    %v648 = vand.u32 %v401, 2147483648
    %v649 = vsel %vm647, %v648, %v646
    %v650 = vrsqrt.pop %v402
    %v651 = vmul.f32 %v402, %v650
    %vm652 = vcmp.eq.f32.partialorder %v402, inf
    %v653 = vsel %vm652, %v402, %v651
    %vm654 = vcmp.eq.f32.partialorder %v402, 0.0
    %v655 = vand.u32 %v402, 2147483648
    %v656 = vsel %vm654, %v655, %v653
    %v657 = vrsqrt.pop %v403
    %v658 = vmul.f32 %v403, %v657
    %vm659 = vcmp.eq.f32.partialorder %v403, inf
    %v660 = vsel %vm659, %v403, %v658
    %vm661 = vcmp.eq.f32.partialorder %v403, 0.0
    %v662 = vand.u32 %v403, 2147483648
    %v663 = vsel %vm661, %v662, %v660
    %v664 = vrsqrt.pop %v404
    %v665 = vmul.f32 %v404, %v664
    %vm666 = vcmp.eq.f32.partialorder %v404, inf
    %v667 = vsel %vm666, %v404, %v665
    %vm668 = vcmp.eq.f32.partialorder %v404, 0.0
    %v669 = vand.u32 %v404, 2147483648
    %v670 = vsel %vm668, %v669, %v667
    %v671 = vmul.f32 %v411, %v411
    %v672 = vmul.f32 %v418, %v418
    %v673 = vmul.f32 %v425, %v425
    %v674 = vmul.f32 %v432, %v432
    %v675 = vmul.f32 %v439, %v439
    %v676 = vmul.f32 %v446, %v446
    %v677 = vmul.f32 %v453, %v453
    %v678 = vmul.f32 %v460, %v460
    %v679 = vmul.f32 %v467, %v467
    %v680 = vmul.f32 %v474, %v474
    %v681 = vmul.f32 %v481, %v481
    %v682 = vmul.f32 %v488, %v488
    %v683 = vmul.f32 %v495, %v495
    %v684 = vmul.f32 %v502, %v502
    %v685 = vmul.f32 %v509, %v509
    %v686 = vmul.f32 %v516, %v516
    %v687 = vmul.f32 %v523, %v523
    %v688 = vmul.f32 %v530, %v530
    %v689 = vmul.f32 %v537, %v537
    %v690 = vmul.f32 %v544, %v544
    %v691 = vmul.f32 %v551, %v551
    %v692 = vmul.f32 %v558, %v558
    %v693 = vmul.f32 %v565, %v565
    %v694 = vmul.f32 %v572, %v572
    %v695 = vmul.f32 %v579, %v579
    %v696 = vmul.f32 %v586, %v586
    %v697 = vmul.f32 %v593, %v593
    %v698 = vmul.f32 %v600, %v600
    %v699 = vmul.f32 %v607, %v607
    %v700 = vmul.f32 %v614, %v614
    %v701 = vmul.f32 %v621, %v621
    %v702 = vmul.f32 %v628, %v628
    %v703 = vmul.f32 %v635, %v635
    %v704 = vmul.f32 %v642, %v642
    %v705 = vmul.f32 %v649, %v649
    %v706 = vmul.f32 %v656, %v656
    %v707 = vmul.f32 %v663, %v663
    %v708 = vmul.f32 %v670, %v670
    %709 = vadd.xlane.f32.xlu0 %v671
    %v710 = vpop.xlane.xlu0 %709
    %711 = vadd.xlane.f32.xlu0 %v672
    %v712 = vpop.xlane.xlu0 %711
    %713 = vadd.xlane.f32.xlu0 %v673
    %v714 = vpop.xlane.xlu0 %713
    %715 = vadd.xlane.f32.xlu0 %v674
    %v716 = vpop.xlane.xlu0 %715
    %717 = vadd.xlane.f32.xlu0 %v675
    %v718 = vpop.xlane.xlu0 %717
    %719 = vadd.xlane.f32.xlu0 %v676
    %v720 = vpop.xlane.xlu0 %719
    %721 = vadd.xlane.f32.xlu0 %v677
    %v722 = vpop.xlane.xlu0 %721
    %723 = vadd.xlane.f32.xlu0 %v678
    %v724 = vpop.xlane.xlu0 %723
    %725 = vadd.xlane.f32.xlu0 %v679
    %v726 = vpop.xlane.xlu0 %725
    %727 = vadd.xlane.f32.xlu0 %v680
    %v728 = vpop.xlane.xlu0 %727
    %729 = vadd.xlane.f32.xlu0 %v681
    %v730 = vpop.xlane.xlu0 %729
    %731 = vadd.xlane.f32.xlu0 %v682
    %v732 = vpop.xlane.xlu0 %731
    %733 = vadd.xlane.f32.xlu0 %v683
    %v734 = vpop.xlane.xlu0 %733
    %735 = vadd.xlane.f32.xlu0 %v684
    %v736 = vpop.xlane.xlu0 %735
    %737 = vadd.xlane.f32.xlu0 %v685
    %v738 = vpop.xlane.xlu0 %737
    %739 = vadd.xlane.f32.xlu0 %v686
    %v740 = vpop.xlane.xlu0 %739
    %741 = vadd.xlane.f32.xlu0 %v687
    %v742 = vpop.xlane.xlu0 %741
    %743 = vadd.xlane.f32.xlu0 %v688
    %v744 = vpop.xlane.xlu0 %743
    %745 = vadd.xlane.f32.xlu0 %v689
    %v746 = vpop.xlane.xlu0 %745
    %747 = vadd.xlane.f32.xlu0 %v690
    %v748 = vpop.xlane.xlu0 %747
    %749 = vadd.xlane.f32.xlu0 %v691
    %v750 = vpop.xlane.xlu0 %749
    %751 = vadd.xlane.f32.xlu0 %v692
    %v752 = vpop.xlane.xlu0 %751
    %753 = vadd.xlane.f32.xlu0 %v693
    %v754 = vpop.xlane.xlu0 %753
    %755 = vadd.xlane.f32.xlu0 %v694
    %v756 = vpop.xlane.xlu0 %755
    %757 = vadd.xlane.f32.xlu0 %v695
    %v758 = vpop.xlane.xlu0 %757
    %759 = vadd.xlane.f32.xlu0 %v696
    %v760 = vpop.xlane.xlu0 %759
    %761 = vadd.xlane.f32.xlu0 %v697
    %v762 = vpop.xlane.xlu0 %761
    %763 = vadd.xlane.f32.xlu0 %v698
    %v764 = vpop.xlane.xlu0 %763
    %765 = vadd.xlane.f32.xlu0 %v699
    %v766 = vpop.xlane.xlu0 %765
    %767 = vadd.xlane.f32.xlu0 %v700
    %v768 = vpop.xlane.xlu0 %767
    %769 = vadd.xlane.f32.xlu0 %v701
    %v770 = vpop.xlane.xlu0 %769
    %771 = vadd.xlane.f32.xlu0 %v702
    %v772 = vpop.xlane.xlu0 %771
    %773 = vadd.xlane.f32.xlu0 %v703
    %v774 = vpop.xlane.xlu0 %773
    %775 = vadd.xlane.f32.xlu0 %v704
    %v776 = vpop.xlane.xlu0 %775
    %777 = vadd.xlane.f32.xlu0 %v705
    %v778 = vpop.xlane.xlu0 %777
    %779 = vadd.xlane.f32.xlu0 %v706
    %v780 = vpop.xlane.xlu0 %779
    %781 = vadd.xlane.f32.xlu0 %v707
    %v782 = vpop.xlane.xlu0 %781
    %v783 = vsel %vm287, %v708, 0.0
    %784 = vadd.xlane.f32.xlu0 %v783
    %v785 = vpop.xlane.xlu0 %784
    %v786 = vmax.f32 %v710, 1e-24
    %v787 = vmax.f32 %v712, 1e-24
    %v788 = vmax.f32 %v714, 1e-24
    %v789 = vmax.f32 %v716, 1e-24
    %v790 = vmax.f32 %v718, 1e-24
    %v791 = vmax.f32 %v720, 1e-24
    %v792 = vmax.f32 %v722, 1e-24
    %v793 = vmax.f32 %v724, 1e-24
    %v794 = vmax.f32 %v726, 1e-24
    %v795 = vmax.f32 %v728, 1e-24
    %v796 = vmax.f32 %v730, 1e-24
    %v797 = vmax.f32 %v732, 1e-24
    %v798 = vmax.f32 %v734, 1e-24
    %v799 = vmax.f32 %v736, 1e-24
    %v800 = vmax.f32 %v738, 1e-24
    %v801 = vmax.f32 %v740, 1e-24
    %v802 = vmax.f32 %v742, 1e-24
    %v803 = vmax.f32 %v744, 1e-24
    %v804 = vmax.f32 %v746, 1e-24
    %v805 = vmax.f32 %v748, 1e-24
    %v806 = vmax.f32 %v750, 1e-24
    %v807 = vmax.f32 %v752, 1e-24
    %v808 = vmax.f32 %v754, 1e-24
    %v809 = vmax.f32 %v756, 1e-24
    %v810 = vmax.f32 %v758, 1e-24
    %v811 = vmax.f32 %v760, 1e-24
    %v812 = vmax.f32 %v762, 1e-24
    %v813 = vmax.f32 %v764, 1e-24
    %v814 = vmax.f32 %v766, 1e-24
    %v815 = vmax.f32 %v768, 1e-24
    %v816 = vmax.f32 %v770, 1e-24
    %v817 = vmax.f32 %v772, 1e-24
    %v818 = vmax.f32 %v774, 1e-24
    %v819 = vmax.f32 %v776, 1e-24
    %v820 = vmax.f32 %v778, 1e-24
    %v821 = vmax.f32 %v780, 1e-24
    %v822 = vmax.f32 %v782, 1e-24
    %v823 = vmax.f32 %v785, 1e-24
    %v824 = vrsqrt.pop %v786
    %v825 = vrsqrt.pop %v787
    %v826 = vrsqrt.pop %v788
    %v827 = vrsqrt.pop %v789
    %v828 = vrsqrt.pop %v790
    %v829 = vrsqrt.pop %v791
    %v830 = vrsqrt.pop %v792
    %v831 = vrsqrt.pop %v793
    %v832 = vrsqrt.pop %v794
    %v833 = vrsqrt.pop %v795
    %v834 = vrsqrt.pop %v796
    %v835 = vrsqrt.pop %v797
    %v836 = vrsqrt.pop %v798
    %v837 = vrsqrt.pop %v799
    %v838 = vrsqrt.pop %v800
    %v839 = vrsqrt.pop %v801
    %v840 = vrsqrt.pop %v802
    %v841 = vrsqrt.pop %v803
    %v842 = vrsqrt.pop %v804
    %v843 = vrsqrt.pop %v805
    %v844 = vrsqrt.pop %v806
    %v845 = vrsqrt.pop %v807
    %v846 = vrsqrt.pop %v808
    %v847 = vrsqrt.pop %v809
    %v848 = vrsqrt.pop %v810
    %v849 = vrsqrt.pop %v811
    %v850 = vrsqrt.pop %v812
    %v851 = vrsqrt.pop %v813
    %v852 = vrsqrt.pop %v814
    %v853 = vrsqrt.pop %v815
    %v854 = vrsqrt.pop %v816
    %v855 = vrsqrt.pop %v817
    %v856 = vrsqrt.pop %v818
    %v857 = vrsqrt.pop %v819
    %v858 = vrsqrt.pop %v820
    %v859 = vrsqrt.pop %v821
    %v860 = vrsqrt.pop %v822
    %v861 = vrsqrt.pop %v823
    %v862 = vmul.f32 %v411, %v824
    %v863 = vmul.f32 %v418, %v825
    %v864 = vmul.f32 %v425, %v826
    %v865 = vmul.f32 %v432, %v827
    %v866 = vmul.f32 %v439, %v828
    %v867 = vmul.f32 %v446, %v829
    %v868 = vmul.f32 %v453, %v830
    %v869 = vmul.f32 %v460, %v831
    %v870 = vmul.f32 %v467, %v832
    %v871 = vmul.f32 %v474, %v833
    %v872 = vmul.f32 %v481, %v834
    %v873 = vmul.f32 %v488, %v835
    %v874 = vmul.f32 %v495, %v836
    %v875 = vmul.f32 %v502, %v837
    %v876 = vmul.f32 %v509, %v838
    %v877 = vmul.f32 %v516, %v839
    %v878 = vmul.f32 %v523, %v840
    %v879 = vmul.f32 %v530, %v841
    %v880 = vmul.f32 %v537, %v842
    %v881 = vmul.f32 %v544, %v843
    %v882 = vmul.f32 %v551, %v844
    %v883 = vmul.f32 %v558, %v845
    %v884 = vmul.f32 %v565, %v846
    %v885 = vmul.f32 %v572, %v847
    %v886 = vmul.f32 %v579, %v848
    %v887 = vmul.f32 %v586, %v849
    %v888 = vmul.f32 %v593, %v850
    %v889 = vmul.f32 %v600, %v851
    %v890 = vmul.f32 %v607, %v852
    %v891 = vmul.f32 %v614, %v853
    %v892 = vmul.f32 %v621, %v854
    %v893 = vmul.f32 %v628, %v855
    %v894 = vmul.f32 %v635, %v856
    %v895 = vmul.f32 %v642, %v857
    %v896 = vmul.f32 %v649, %v858
    %v897 = vmul.f32 %v656, %v859
    %v898 = vmul.f32 %v663, %v860
    %v899 = vmul.f32 %v670, %v861
    %900 = vst [vmem:[#allocation5] sm:$0xff] %v862
    %901 = vst [vmem:[#allocation5 + $0x8] sm:$0xff] %v863
    %902 = vst [vmem:[#allocation5 + $0x10] sm:$0xff] %v864
    %903 = vst [vmem:[#allocation5 + $0x18] sm:$0xff] %v865
    %904 = vst [vmem:[#allocation5 + $0x20] sm:$0xff] %v866
    %905 = vst [vmem:[#allocation5 + $0x28] sm:$0xff] %v867
    %906 = vst [vmem:[#allocation5 + $0x30] sm:$0xff] %v868
    %907 = vst [vmem:[#allocation5 + $0x38] sm:$0xff] %v869
    %908 = vst [vmem:[#allocation5 + $0x40] sm:$0xff] %v870
    %909 = vst [vmem:[#allocation5 + $0x48] sm:$0xff] %v871
    %910 = vst [vmem:[#allocation5 + $0x50] sm:$0xff] %v872
    %911 = vst [vmem:[#allocation5 + $0x58] sm:$0xff] %v873
    %912 = vst [vmem:[#allocation5 + $0x60] sm:$0xff] %v874
    %913 = vst [vmem:[#allocation5 + $0x68] sm:$0xff] %v875
    %914 = vst [vmem:[#allocation5 + $0x70] sm:$0xff] %v876
    %915 = vst [vmem:[#allocation5 + $0x78] sm:$0xff] %v877
    %916 = vst [vmem:[#allocation5 + $0x80] sm:$0xff] %v878
    %917 = vst [vmem:[#allocation5 + $0x88] sm:$0xff] %v879
    %918 = vst [vmem:[#allocation5 + $0x90] sm:$0xff] %v880
    %919 = vst [vmem:[#allocation5 + $0x98] sm:$0xff] %v881
    %920 = vst [vmem:[#allocation5 + $0xa0] sm:$0xff] %v882
    %921 = vst [vmem:[#allocation5 + $0xa8] sm:$0xff] %v883
    %922 = vst [vmem:[#allocation5 + $0xb0] sm:$0xff] %v884
    %923 = vst [vmem:[#allocation5 + $0xb8] sm:$0xff] %v885
    %924 = vst [vmem:[#allocation5 + $0xc0] sm:$0xff] %v886
    %925 = vst [vmem:[#allocation5 + $0xc8] sm:$0xff] %v887
    %926 = vst [vmem:[#allocation5 + $0xd0] sm:$0xff] %v888
    %927 = vst [vmem:[#allocation5 + $0xd8] sm:$0xff] %v889
    %928 = vst [vmem:[#allocation5 + $0xe0] sm:$0xff] %v890
    %929 = vst [vmem:[#allocation5 + $0xe8] sm:$0xff] %v891
    %930 = vst [vmem:[#allocation5 + $0xf0] sm:$0xff] %v892
    %931 = vst [vmem:[#allocation5 + $0xf8] sm:$0xff] %v893
    %932 = vst [vmem:[#allocation5 + $0x100] sm:$0xff] %v894
    %933 = vst [vmem:[#allocation5 + $0x108] sm:$0xff] %v895
    %934 = vst [vmem:[#allocation5 + $0x110] sm:$0xff] %v896
    %935 = vst [vmem:[#allocation5 + $0x118] sm:$0xff] %v897
    %936 = vst [vmem:[#allocation5 + $0x120] sm:$0xff] %v898
    %937 = vst [vmem:[#allocation5 + $0x128] sm:$0xf] %v899
    // Predicated region
    $region10: #{tpu_custom_call.1} parent=1 // pred_check
      _
    $region11: #{tpu_custom_call.1} parent=1 // pred_check_branch
      %939 = sbr.rel (0) target = $region13
    $region12: #{tpu_custom_call.1} parent=1 // pred_region
      %s941 = ssub.s32 4864, 4864
      %942 = vsyncadd [#allocation4], %s941
      %s943 = sshll.u32 [#allocation5], 4
      %s944 = int_to_ptr.vmem [resolvable:$true] %s943
      %949 = dma.vmem_to_hbm [thread:$0]  %s944, 4864, %s1, [#allocation4], 128, 128, 8
    $region13: #{tpu_custom_call.1} parent=1 // pred_fallthru
      _
    // Predicated region
    $region14: #{tpu_custom_call.1} parent=1 // pred_check
      _
    $region15: #{tpu_custom_call.1} parent=1 // pred_check_branch
      %951 = sbr.rel (0) target = $region17
    $region16: #{tpu_custom_call.1} parent=1 // pred_region
      %952 = dma.done [#allocation4], 4864
    $region17: #{tpu_custom_call.1} parent=1 // pred_fallthru
      _
    %953 = vsyncpa [#allocation3], 1
    %954 = vsyncpa [#allocation4], 1

</llo_original>
